<compile_context>
chip_gen: v5e
topology: v5e:2x2
jax: 0.10.0
libtpu: 0.0.40
codegen_flags: <defaults>
</compile_context>

<pallas_src>
import jax
import jax.numpy as jnp
from jax.experimental import pallas as pl
from jax.experimental.pallas import tpu as pltpu


def _round_up(x, m):
    return ((x + m - 1) // m) * m


def _vmem_plan(itemsize):
    """Generation-gated (vmem_limit_bytes, per-tile HBM byte budget)."""
    cap = None
    try:
        info = pltpu.get_tpu_info()
        for name in ("vmem_capacity_bytes", "vmem_bytes", "vmem_size_bytes"):
            cap = getattr(info, name, None)
            if cap is not None:
                break
    except Exception:  # pragma: no cover - CPU interpret / old runtime
        cap = None

    if cap is not None and cap >= 100 * 1024 * 1024:
        limit = 96 * 1024 * 1024          # v5e / v6e : 128 MiB physical VMEM
    else:
        limit = 48 * 1024 * 1024          # v7x (64 MiB physical) or unknown

    # In-kernel working set per step ~= 2x double-buffered input tile
    # + ~4 materialized f32-sized (TILE_N, C) temps (cast / shifted / exp / select).
    expansion = 2 + 4 * max(4 // itemsize, 1)   # bf16: 10x tile bytes, f32: 6x
    tile_budget = (limit // 2) // expansion     # keep ~2x headroom
    return limit, tile_budget


def _choose_tile_n(n, c, itemsize, tile_budget_bytes):
    """Row-tile size: largest tile within budget; sublane-packing friendly rows."""
    mult = 16 if itemsize < 4 else 8            # bf16 packs (16,128); f32 (8,128)
    row_bytes = max(c * itemsize, 1)
    tile = tile_budget_bytes // row_bytes
    tile = max(mult, (tile // mult) * mult)
    n_round = _round_up(n, mult)
    return min(tile, n_round)                    # single (possibly ragged) tile if it fits


def _ce_partial_kernel(logits_ref, target_ref, weff_ref, partial_ref):
    """One row tile -> one (1, 1) partial sum of weighted NLL.

    logits_ref : (TILE_N, C) input dtype -- raw scores (last tile may be ragged)
    target_ref : (TILE_N, 1) int32       -- class index per row
    weff_ref   : (TILE_N, 1) float32     -- weight[target[i]] * valid[i] (0 for
                                            ignored rows AND for padded rows)
    partial_ref: (1, 1) float32          -- this tile's partial sum
    """
    logits = logits_ref[...].astype(jnp.float32)        # f32 math, bf16 only on HBM side
    tgt = target_ref[...]                                # (TN, 1) int32
    weff = weff_ref[...]                                 # (TN, 1) f32
    tn, c = logits.shape

    # -log softmax(x)[i, t] = log(sum exp(x_i - m_i)) - (x_i[t] - m_i); row_max cancels.
    row_max = jnp.max(logits, axis=-1, keepdims=True)                         # (TN, 1)
    shifted = logits - row_max                                                # (TN, C)
    sum_exp = jnp.sum(jnp.exp(shifted), axis=-1, keepdims=True)               # (TN, 1)

    col_ids = jax.lax.broadcasted_iota(jnp.int32, (tn, c), 1)                 # (TN, C)
    shifted_at_tgt = jnp.sum(jnp.where(col_ids == tgt, shifted, 0.0),
                             axis=-1, keepdims=True)                          # (TN, 1)

    nll = jnp.log(sum_exp) - shifted_at_tgt                                   # (TN, 1)

    # jnp.where (not multiply-by-zero): ragged-tile rows have undefined logits,
    # so nll may be NaN/Inf there -- weff == 0 selects an exact 0 instead.
    contrib = jnp.where(weff != 0.0, weff * nll, 0.0)                         # (TN, 1)
    partial_ref[...] = jnp.sum(contrib, keepdims=True)                        # (1, 1)


def handle_cross_entropy_loss(output, target, *, ignore_index=-1, weight=None, tile_n=None):
    """JAX/Pallas equivalent of Handle_Cross_Entropy_Loss.forward.

    output : (N, C) float array of raw scores (f32 or bf16; bf16 halves HBM traffic,
             at the cost of a bf16-quantized logsumexp)
    target : (N,) int array of class indices (ignore_index marks skipped rows)
    weight : optional (C,) float array of per-class weights
    Returns a scalar float32 loss.  Divisor is the COUNT of valid rows (not the
    weight sum) -- matching the original Python loop, not torch CrossEntropyLoss.
    Precondition (as in the original): at least one row with target != ignore_index.
    """
    output = jnp.asarray(output)                       # keep HBM dtype
    target = jnp.asarray(target, dtype=jnp.int32)
    n, c = output.shape

    # ---- wrapper-side O(N) scalar work (plain XLA) -----------------------
    valid = target != ignore_index
    count = jnp.sum(valid.astype(jnp.float32))         # divisor (count, not weight sum)

    if weight is None:
        w_at_tgt = jnp.ones((n,), dtype=jnp.float32)
    else:
        w = jnp.asarray(weight, dtype=jnp.float32)
        if ignore_index != -1:
            w = w.at[ignore_index].set(0.0)            # mirrors the module's __init__
        w_at_tgt = w[jnp.clip(target, 0, c - 1)]       # clamp so target == -1 gathers in-bounds
    w_eff = jnp.where(valid, w_at_tgt, 0.0)            # 0 for ignored rows

    # ---- tiling -----------------------------------------------------------
    itemsize = output.dtype.itemsize
    vmem_limit, tile_budget = _vmem_plan(itemsize)
    if tile_n is None:
        tile_n = _choose_tile_n(n, c, itemsize, tile_budget)
    else:
        mult = 16 if itemsize < 4 else 8
        tile_n = max(mult, (int(tile_n) // mult) * mult)

    num_tiles = pl.cdiv(n, tile_n)
    n_pad = num_tiles * tile_n

    # Only the tiny per-row vectors get padded (NOT the (N, C) logits).
    if n_pad != n:
        pad = n_pad - n
        target_k = jnp.pad(target, (0, pad))                       # padded rows masked via w_eff
        w_eff_k = jnp.pad(w_eff, (0, pad))                         # 0 -> no contribution
    else:
        target_k = target
        w_eff_k = w_eff

    partials = pl.pallas_call(
        _ce_partial_kernel,
        out_shape=jax.ShapeDtypeStruct((num_tiles, 1), jnp.float32),
        grid=(num_tiles,),
        in_specs=[
            pl.BlockSpec((tile_n, c), lambda i: (i, 0)),   # logits row tile (ragged last tile OK)
            pl.BlockSpec((tile_n, 1), lambda i: (i, 0)),   # targets
            pl.BlockSpec((tile_n, 1), lambda i: (i, 0)),   # weight[target] * valid
        ],
        out_specs=pl.BlockSpec((1, 1), lambda i: (i, 0)),  # per-tile partial sum
        compiler_params=pltpu.CompilerParams(
            dimension_semantics=("parallel",),             # independent tiles -> both v7x TCs
            vmem_limit_bytes=vmem_limit,                   # generation-gated (96 vs 48 MiB)
        ),
    )(output, target_k.reshape(n_pad, 1), w_eff_k.reshape(n_pad, 1))

    total = jnp.sum(partials)                              # tiny O(num_tiles) XLA reduce
    return total / count


def _reference(output, target, ignore_index=-1, weight=None):
    """Pure-JAX reference mirroring the PyTorch loop."""
    logits = jnp.asarray(output, jnp.float32)
    log_sm = jax.nn.log_softmax(logits, axis=1)
    nll = -log_sm[jnp.arange(logits.shape[0]), target]
    if weight is not None:
        w = jnp.asarray(weight, jnp.float32)
        if ignore_index != -1:
            w = w.at[ignore_index].set(0.0)
        nll = nll * w[target]
    valid = (target != ignore_index).astype(jnp.float32)
    return jnp.sum(nll * valid) / jnp.sum(valid)


if __name__ == "__main__":
    key = jax.random.PRNGKey(0)
    k1, k2, k3, k4, k5, k6, k7 = jax.random.split(key, 7)

    # Case 1: small f32 problem, no class weights, ignore_index = -1 (single tile).
    N1, C1 = 8, 32
    out1 = jax.random.normal(k1, (N1, C1), dtype=jnp.float32)
    tgt1 = jax.random.randint(k2, (N1,), 0, C1, dtype=jnp.int32)
    tgt1 = tgt1.at[1].set(-1).at[5].set(-1)          # ignored rows
    loss1 = jax.block_until_ready(handle_cross_entropy_loss(out1, tgt1, ignore_index=-1))
    ref1 = _reference(out1, tgt1, ignore_index=-1)
    assert jnp.allclose(loss1, ref1, atol=1e-5, rtol=1e-5), (loss1, ref1)

    # Case 2: bf16 logits, class weights, ignore_index = 0, forced tile_n=64
    # -> 4 grid steps with a ragged last tile (no logits pad), masking exercised.
    N2, C2 = 200, 96
    out2 = jax.random.normal(k3, (N2, C2), dtype=jnp.bfloat16)
    tgt2 = jax.random.randint(k4, (N2,), 0, C2, dtype=jnp.int32)
    tgt2 = tgt2.at[3].set(0).at[17].set(0)           # ignored rows (ignore_index = 0)
    wgt2 = jax.random.uniform(k5, (C2,), dtype=jnp.float32, minval=0.5, maxval=1.5)
    loss2 = jax.block_until_ready(
        handle_cross_entropy_loss(out2, tgt2, ignore_index=0, weight=wgt2, tile_n=64))
    ref2 = _reference(out2, tgt2, ignore_index=0, weight=wgt2)
    assert jnp.allclose(loss2, ref2, atol=1e-4, rtol=1e-4), (loss2, ref2)

    # Case 3: bf16, auto tiling, N not a multiple of 16 -> ragged single tile path.
    N3, C3 = 130, 160
    out3 = jax.random.normal(k6, (N3, C3), dtype=jnp.bfloat16)
    tgt3 = jax.random.randint(k7, (N3,), 0, C3, dtype=jnp.int32)
    tgt3 = tgt3.at[0].set(-1).at[77].set(-1)
    loss3 = jax.block_until_ready(handle_cross_entropy_loss(out3, tgt3, ignore_index=-1))
    ref3 = _reference(out3, tgt3, ignore_index=-1)
    assert jnp.allclose(loss3, ref3, atol=1e-4, rtol=1e-4), (loss3, ref3)

    print("KERNEL_OK")
</pallas_src>

<mosaic_0001>
module attributes {stable_mosaic.version = 11 : i64} {
  func.func @_ce_partial_kernel(%arg0: i32, %arg1: memref<8x32xf32, #tpu.memory_space<vmem>>, %arg2: memref<8x1xi32, #tpu.memory_space<vmem>>, %arg3: memref<8x1xf32, #tpu.memory_space<vmem>>, %arg4: memref<1x1xf32, #tpu.memory_space<vmem>>) attributes {dimension_semantics = [#tpu.dimension_semantics<parallel>], iteration_bounds = array<i64: 1>, scalar_prefetch = 0 : i64, scratch_operands = 0 : i64, tpu.core_type = #tpu.core_type<tc>, window_params = [{transform_indices = @transform_0, window_bounds = array<i64: 8, 32>}, {transform_indices = @transform_1, window_bounds = array<i64: 8, 1>}, {transform_indices = @transform_2, window_bounds = array<i64: 8, 1>}, {transform_indices = @transform_3, window_bounds = array<i64: 1, 1>}]} {
    %c0 = arith.constant 0 : index
    %c0_0 = arith.constant 0 : index
    %0 = vector.load %arg1[%c0, %c0_0] : memref<8x32xf32, #tpu.memory_space<vmem>>, vector<8x32xf32>
    %c0_1 = arith.constant 0 : index
    %c0_2 = arith.constant 0 : index
    %1 = vector.load %arg2[%c0_1, %c0_2] : memref<8x1xi32, #tpu.memory_space<vmem>>, vector<8x1xi32>
    %c0_3 = arith.constant 0 : index
    %c0_4 = arith.constant 0 : index
    %2 = vector.load %arg3[%c0_3, %c0_4] : memref<8x1xf32, #tpu.memory_space<vmem>>, vector<8x1xf32>
    %cst = arith.constant dense<0xFF800000> : vector<8xf32>
    %3 = vector.multi_reduction <maximumf>, %0, %cst [1] : vector<8x32xf32> to vector<8xf32>
    %4 = vector.shape_cast %3 : vector<8xf32> to vector<8x1xf32>
    %5 = vector.broadcast %4 : vector<8x1xf32> to vector<8x32xf32>
    %6 = arith.subf %0, %5 : vector<8x32xf32>
    %7 = math.exp %6 : vector<8x32xf32>
    %cst_5 = arith.constant dense<0.000000e+00> : vector<8xf32>
    %8 = vector.multi_reduction <add>, %7, %cst_5 [1] : vector<8x32xf32> to vector<8xf32>
    %9 = vector.shape_cast %8 : vector<8xf32> to vector<8x1xf32>
    %10 = tpu.iota {dimensions = array<i32: 1>} : vector<8x32xi32>
    %11 = vector.broadcast %1 : vector<8x1xi32> to vector<8x32xi32>
    %12 = arith.cmpi eq, %10, %11 : vector<8x32xi32>
    %cst_6 = arith.constant 0.000000e+00 : f32
    %13 = vector.broadcast %cst_6 : f32 to vector<8x32xf32>
    %14 = arith.select %12, %6, %13 : vector<8x32xi1>, vector<8x32xf32>
    %cst_7 = arith.constant dense<0.000000e+00> : vector<8xf32>
    %15 = vector.multi_reduction <add>, %14, %cst_7 [1] : vector<8x32xf32> to vector<8xf32>
    %16 = vector.shape_cast %15 : vector<8xf32> to vector<8x1xf32>
    %17 = math.log %9 : vector<8x1xf32>
    %18 = arith.subf %17, %16 : vector<8x1xf32>
    %cst_8 = arith.constant 0.000000e+00 : f32
    %19 = vector.broadcast %cst_8 : f32 to vector<8x1xf32>
    %20 = arith.cmpf one, %2, %19 : vector<8x1xf32>
    %21 = arith.mulf %2, %18 : vector<8x1xf32>
    %cst_9 = arith.constant 0.000000e+00 : f32
    %22 = vector.broadcast %cst_9 : f32 to vector<8x1xf32>
    %23 = arith.select %20, %21, %22 : vector<8x1xi1>, vector<8x1xf32>
    %24 = vector.shape_cast %23 : vector<8x1xf32> to vector<1x8x1xf32>
    %cst_10 = arith.constant dense<0.000000e+00> : vector<1xf32>
    %25 = vector.multi_reduction <add>, %24, %cst_10 [1, 2] : vector<1x8x1xf32> to vector<1xf32>
    %26 = vector.shape_cast %25 : vector<1xf32> to vector<1x1x1xf32>
    %27 = vector.extract %26[0, 0, 0] : f32 from vector<1x1x1xf32>
    %28 = vector.broadcast %27 : f32 to vector<1x1xf32>
    %c0_11 = arith.constant 0 : index
    %c0_12 = arith.constant 0 : index
    %29 = vector.load %arg4[%c0_11, %c0_12] : memref<1x1xf32, #tpu.memory_space<vmem>>, vector<1x1xf32>
    tpu.vector_store %arg4[%c0_11, %c0_12], %28 {strides = array<i32>} : memref<1x1xf32, #tpu.memory_space<vmem>>, vector<1x1xf32>,
    return
  }
  func.func @transform_0(%arg0: i32) -> (i32, i32) {
    %c0_i32 = arith.constant 0 : i32
    %c0_i32_0 = arith.constant 0 : i32
    return %arg0, %c0_i32 : i32, i32
  }
  func.func @transform_1(%arg0: i32) -> (i32, i32) {
    %c0_i32 = arith.constant 0 : i32
    %c0_i32_0 = arith.constant 0 : i32
    return %arg0, %c0_i32 : i32, i32
  }
  func.func @transform_2(%arg0: i32) -> (i32, i32) {
    %c0_i32 = arith.constant 0 : i32
    %c0_i32_0 = arith.constant 0 : i32
    return %arg0, %c0_i32 : i32, i32
  }
  func.func @transform_3(%arg0: i32) -> (i32, i32) {
    %c0_i32 = arith.constant 0 : i32
    %c0_i32_0 = arith.constant 0 : i32
    return %arg0, %c0_i32 : i32, i32
  }
}

</mosaic_0001>

<llo_original>
// kernel: tpu_custom_call.1
$region0: #{tpu_custom_call.1}
  #allocation0 [shape = 'u32[]', space=smem, size = 0x4, offset = 0x4, fixed_abs, tag = 'smem constant byte address 0x4 - core index']
  #allocation1 [shape = 'u32[72,128]{1,0:T(1,128)}', space=vmem, size = 0x9000, scoped, tag = 'internal scratch']
  %s0 = inlined_call_operand.vmem [shape: f32[8,32], index: 0, kind: input, shape index: {}]
  %s1 = inlined_call_operand.vmem [shape: s32[8,1], index: 1, kind: input, shape index: {}]
  %s2 = inlined_call_operand.vmem [shape: f32[8,1], index: 2, kind: input, shape index: {}]
  %s3 = inlined_call_operand.hbm [shape: f32[1,1], index: 3, kind: output, shape index: {}]
  %s4 = sld [smem:[#allocation0]]
  $region22: #{tpu_custom_call.1} parent=0
    _
  %s6 = ssub.s32 1, %s4
  %s7 = scalar_select 0, %s6, %s4
  $region1: #{tpu_custom_call.1} parent=0
    #allocation2 [shape = 'u8[512]{0}', space=vmem, size = 0x400, scoped, tag = 'output window, operand 0, single buffered']
    #allocation3 [shape = 's32[1]{0}', space=sflag, size = 0x4, scoped, tag = 'scoped memory for tpu_custom_call.1']
    %8 = vsyncpa [#allocation3], 0
    // Predicated region
    $region2: #{tpu_custom_call.1} parent=1 // pred_check
      _
    $region3: #{tpu_custom_call.1} parent=1 // pred_check_branch
      %10 = sbr.rel (0) target = $region5
    $region4: #{tpu_custom_call.1} parent=1 // pred_region
      _
    $region5: #{tpu_custom_call.1} parent=1 // pred_fallthru
      _
    // Predicated region
    $region6: #{tpu_custom_call.1} parent=1 // pred_check
      _
    $region7: #{tpu_custom_call.1} parent=1 // pred_check_branch
      %12 = sbr.rel (0) target = $region9
    $region8: #{tpu_custom_call.1} parent=1 // pred_region
      _
    $region9: #{tpu_custom_call.1} parent=1 // pred_fallthru
      _
    // Predicated region
    $region10: #{tpu_custom_call.1} parent=1 // pred_check
      _
    $region11: #{tpu_custom_call.1} parent=1 // pred_check_branch
      %14 = sbr.rel (0) target = $region13
    $region12: #{tpu_custom_call.1} parent=1 // pred_region
      _
    $region13: #{tpu_custom_call.1} parent=1 // pred_fallthru
      _
    %v15 = vld [vmem:[%s0] sm:$0xff]
    %v16 = vld [vmem:[%s1] sm:$0xff]
    %v17 = vld [vmem:[%s2] sm:$0xff]
    %vm18 = vcmask 261120
    %v19 = vsel %vm18, %v15, -inf
    %20 = vmax.xlane.f32.xlu0 %v19
    %v21 = vpop.xlane.xlu0 %20
    %v22 = vsub.f32 %v15, %v21
    %v23 = vmul.f32 %v22, 1.442695
    %v24 = vpow.pop %v23
    %v25 = vsel %vm18, %v24, 0.0
    %26 = vadd.xlane.f32.xlu0 %v25
    %v27 = vpop.xlane.xlu0 %26
    %v28 = vlaneseq
    %v29 = vand.u32 %v28, 127
    %30 = vset.pattern.permute.xlu0 0
    %31 = vperm.xlu0 %30, %v16
    %v32 = vpop.permute.xlu0 %31
    %vm33 = vcmp.eq.s32.totalorder %v29, %v32
    %v34 = vsel %vm33, %v22, 0.0
    %v35 = vsel %vm18, %v34, 0.0
    %36 = vadd.xlane.f32.xlu0 %v35
    %v37 = vpop.xlane.xlu0 %36
    %v38 = vlog2.pop %v27
    %v39 = vmul.f32 %v38, 0.6931472
    %v40 = vsub.f32 %v39, %v37
    %vm41 = vcmp.ne.f32.partialorder %v17, 0.0
    %v42 = vmul.f32 %v17, %v40
    %v43 = vsel %vm41, %v42, 0.0
    %vm44 = vcmask 7168
    %v45 = vsel %vm44, %v43, 0.0
    %46 = vadd.xlane.f32.xlu0 %v45
    %v47 = vpop.xlane.xlu0 %46
    %v48 = vrot.slane %v47, 4
    %v49 = vadd.f32 %v47, %v48
    %v50 = vrot.slane %v49, 2
    %v51 = vadd.f32 %v49, %v50
    %v52 = vrot.slane %v51, 1
    %v53 = vadd.f32 %v51, %v52
    %s54 = vtos %v53
    %v55 = vstv %s54
    %vm56 = vcmask 0
    %57 = vst.msk [vmem:[#allocation2] sm:$0x1] %vm56, %v55
    // Predicated region
    $region14: #{tpu_custom_call.1} parent=1 // pred_check
      _
    $region15: #{tpu_custom_call.1} parent=1 // pred_check_branch
      %59 = sbr.rel (0) target = $region17
    $region16: #{tpu_custom_call.1} parent=1 // pred_region
      %61 = vsyncadd [#allocation3], 0
      %s63 = sshll.u32 [#allocation2], 4
      %s64 = int_to_ptr.vmem [resolvable:$true] %s63
      %s65 = sshll.u32 %s3, 4
      %s66 = int_to_ptr.hbm [resolvable:$true] %s65
      %68 = dma.vmem_to_hbm [thread:$0]  %s64, 16, %s66, [#allocation3]
    $region17: #{tpu_custom_call.1} parent=1 // pred_fallthru
      _
    // Predicated region
    $region18: #{tpu_custom_call.1} parent=1 // pred_check
      _
    $region19: #{tpu_custom_call.1} parent=1 // pred_check_branch
      %70 = sbr.rel (0) target = $region21
    $region20: #{tpu_custom_call.1} parent=1 // pred_region
      %72 = dma.done [#allocation3], 16
    $region21: #{tpu_custom_call.1} parent=1 // pred_fallthru
      _
    %73 = vsyncpa [#allocation3], 1

</llo_original>
